<compile_context>
chip_gen: v5e
topology: v5e:2x2
jax: 0.10.0
libtpu: 0.0.40
codegen_flags: <defaults>
</compile_context>

<pallas_src>
import functools

import jax
import jax.numpy as jnp
from jax.experimental import pallas as pl
from jax.experimental.pallas import tpu as pltpu


HIDDEN1 = 512
HIDDEN2 = 256
LANE = 128
SUBLANE = 8


def _round_up(x, m):
    return ((x + m - 1) // m) * m


def dqn_kernel(x_ref, w1_ref, b1_ref, w2_ref, b2_ref, w3_ref, b3_ref, o_ref):
    # x tile: (TM, in_pad) f32 -> bf16 for the MXU; accumulate in f32.
    x = x_ref[...].astype(jnp.bfloat16)

    h1 = jnp.dot(x, w1_ref[...], preferred_element_type=jnp.float32) + b1_ref[...]
    h1 = jnp.maximum(h1, 0.0).astype(jnp.bfloat16)  # relu, back to bf16 for next dot

    h2 = jnp.dot(h1, w2_ref[...], preferred_element_type=jnp.float32) + b2_ref[...]
    h2 = jnp.maximum(h2, 0.0).astype(jnp.bfloat16)  # relu

    out = jnp.dot(h2, w3_ref[...], preferred_element_type=jnp.float32) + b3_ref[...]
    o_ref[...] = out.astype(o_ref.dtype)  # lane-dense (TM, n_pad) store


def dqn_forward(x, packed_params, out_size, *, tm=512):
    """x: (B, input_size) f32, packed_params from pack_params -> (B, out_size) f32."""
    w1, b1, w2, b2, w3, b3 = packed_params
    B, in_size = x.shape
    in_pad = w1.shape[0]      # input dim padded to a multiple of 128 lanes
    n_pad = w3.shape[1]       # output dim padded to a multiple of 128 lanes

    # Batch tiling: TM rows per grid step (multiple of 8 sublanes), capped by B.
    TM = min(tm, _round_up(B, SUBLANE))
    B_pad = _round_up(B, TM)
    if B_pad != B or in_pad != in_size:
        x = jnp.pad(x, ((0, B_pad - B), (0, in_pad - in_size)))
    grid = (B_pad // TM,)

    resident = lambda shape: pl.BlockSpec(shape, lambda i: (0, 0))  # stays in VMEM

    # Advisory cost estimate so XLA can overlap neighbors with this call.
    flops = 2 * B_pad * (in_pad * HIDDEN1 + HIDDEN1 * HIDDEN2 + HIDDEN2 * n_pad)
    param_bytes = sum(int(p.size) * p.dtype.itemsize for p in packed_params)
    bytes_accessed = int(x.size) * 4 + param_bytes + B_pad * n_pad * 4
    cost = pl.CostEstimate(flops=flops, transcendentals=0,
                           bytes_accessed=bytes_accessed)

    # Actual VMEM footprint: resident params + double-buffered x/out tiles +
    # intermediate activations + headroom.
    vmem_limit = (param_bytes
                  + 2 * (TM * in_pad * 4 + TM * n_pad * 4)
                  + 2 * TM * (HIDDEN1 + HIDDEN2) * 4
                  + (4 << 20))

    out_padded = pl.pallas_call(
        dqn_kernel,
        out_shape=jax.ShapeDtypeStruct((B_pad, n_pad), jnp.float32),
        grid=grid,
        in_specs=[
            pl.BlockSpec((TM, in_pad), lambda i: (i, 0)),  # x tile per grid step
            resident(w1.shape), resident(b1.shape),
            resident(w2.shape), resident(b2.shape),
            resident(w3.shape), resident(b3.shape),
        ],
        out_specs=pl.BlockSpec((TM, n_pad), lambda i: (i, 0)),
        compiler_params=pltpu.CompilerParams(
            dimension_semantics=("parallel",),
            vmem_limit_bytes=int(vmem_limit),
        ),
        cost_estimate=cost,
    )(x, w1, b1, w2, b2, w3, b3)

    return out_padded[:B, :out_size]


def init_dqn_params(key, input_size, output_size):
    """Synthetic init matching nn.Linear fan-in uniform; stored as (in, out) f32."""
    k1, k2, k3, k4, k5, k6 = jax.random.split(key, 6)

    def uniform_fan_in(k, shape, fan_in):
        bound = 1.0 / jnp.sqrt(fan_in)
        return jax.random.uniform(k, shape, jnp.float32, -bound, bound)

    w1 = uniform_fan_in(k1, (input_size, HIDDEN1), input_size)
    b1 = uniform_fan_in(k2, (1, HIDDEN1), input_size)
    w2 = uniform_fan_in(k3, (HIDDEN1, HIDDEN2), HIDDEN1)
    b2 = uniform_fan_in(k4, (1, HIDDEN2), HIDDEN1)
    w3 = uniform_fan_in(k5, (HIDDEN2, output_size), HIDDEN2)
    b3 = uniform_fan_in(k6, (1, output_size), HIDDEN2)
    return (w1, b1, w2, b2, w3, b3)


def pack_params(params):
    """Kernel layout: bf16 weights, f32 biases; layer-1 input dim and layer-3
    output dim zero-padded to a multiple of 128 lanes."""
    w1, b1, w2, b2, w3, b3 = params
    in_size = w1.shape[0]
    out_size = w3.shape[1]
    in_pad = _round_up(in_size, LANE)
    n_pad = _round_up(out_size, LANE)
    w1p = jnp.pad(w1, ((0, in_pad - in_size), (0, 0)))   # zero rows -> same result
    w3p = jnp.pad(w3, ((0, 0), (0, n_pad - out_size)))
    b3p = jnp.pad(b3, ((0, 0), (0, n_pad - out_size)))
    return (w1p.astype(jnp.bfloat16), b1,
            w2.astype(jnp.bfloat16), b2,
            w3p.astype(jnp.bfloat16), b3p)


def dqn_reference(x, packed_params, out_size):
    """Pure-JAX reference mimicking the kernel's bf16-in / f32-accumulate math."""
    w1, b1, w2, b2, w3, b3 = packed_params
    in_pad = w1.shape[0]
    xp = jnp.pad(x, ((0, 0), (0, in_pad - x.shape[1])))
    f32 = lambda a: a.astype(jnp.float32)
    bf = lambda a: a.astype(jnp.bfloat16).astype(jnp.float32)
    h1 = jnp.maximum(bf(xp) @ f32(w1) + b1, 0.0)
    h2 = jnp.maximum(bf(h1) @ f32(w2) + b2, 0.0)
    out = bf(h2) @ f32(w3) + b3
    return out[:, :out_size]


if __name__ == "__main__":
    key = jax.random.PRNGKey(0)
    k_param, k_x = jax.random.split(key)

    batch = 8
    input_size = 32   # flattened observation vector
    output_size = 8   # number of actions

    params = init_dqn_params(k_param, input_size, output_size)
    packed = pack_params(params)
    x = jax.random.normal(k_x, (batch, input_size), jnp.float32)

    fwd = functools.partial(dqn_forward, out_size=output_size)
    out = fwd(x, packed)
    out = jax.block_until_ready(out)

    ref = dqn_reference(x, packed, output_size)
    assert out.shape == (batch, output_size)
    assert jnp.allclose(out, ref, atol=1e-2, rtol=1e-2), (
        float(jnp.max(jnp.abs(out - ref))))

    print("KERNEL_OK")
</pallas_src>

<mosaic_0001>
module attributes {stable_mosaic.version = 11 : i64} {
  func.func @dqn_kernel(%arg0: i32, %arg1: memref<8x128xf32, #tpu.memory_space<vmem>>, %arg2: memref<128x512xbf16, #tpu.memory_space<vmem>>, %arg3: memref<1x512xf32, #tpu.memory_space<vmem>>, %arg4: memref<512x256xbf16, #tpu.memory_space<vmem>>, %arg5: memref<1x256xf32, #tpu.memory_space<vmem>>, %arg6: memref<256x128xbf16, #tpu.memory_space<vmem>>, %arg7: memref<1x128xf32, #tpu.memory_space<vmem>>, %arg8: memref<8x128xf32, #tpu.memory_space<vmem>>) attributes {dimension_semantics = [#tpu.dimension_semantics<parallel>], iteration_bounds = array<i64: 1>, scalar_prefetch = 0 : i64, scratch_operands = 0 : i64, tpu.core_type = #tpu.core_type<tc>, window_params = [{transform_indices = @transform_0, window_bounds = array<i64: 8, 128>}, {pipeline_mode = #tpu.pipeline_mode<synchronous>, transform_indices = @transform_1, window_bounds = array<i64: 128, 512>}, {pipeline_mode = #tpu.pipeline_mode<synchronous>, transform_indices = @transform_2, window_bounds = array<i64: 1, 512>}, {pipeline_mode = #tpu.pipeline_mode<synchronous>, transform_indices = @transform_3, window_bounds = array<i64: 512, 256>}, {pipeline_mode = #tpu.pipeline_mode<synchronous>, transform_indices = @transform_4, window_bounds = array<i64: 1, 256>}, {pipeline_mode = #tpu.pipeline_mode<synchronous>, transform_indices = @transform_5, window_bounds = array<i64: 256, 128>}, {pipeline_mode = #tpu.pipeline_mode<synchronous>, transform_indices = @transform_6, window_bounds = array<i64: 1, 128>}, {transform_indices = @transform_7, window_bounds = array<i64: 8, 128>}]} {
    %c0 = arith.constant 0 : index
    %c0_0 = arith.constant 0 : index
    %0 = vector.load %arg1[%c0, %c0_0] : memref<8x128xf32, #tpu.memory_space<vmem>>, vector<8x128xf32>
    %1 = arith.truncf %0 : vector<8x128xf32> to vector<8x128xbf16>
    %c0_1 = arith.constant 0 : index
    %c0_2 = arith.constant 0 : index
    %2 = vector.load %arg2[%c0_1, %c0_2] : memref<128x512xbf16, #tpu.memory_space<vmem>>, vector<128x512xbf16>
    %cst = arith.constant dense<0.000000e+00> : vector<8x512xf32>
    %3 = tpu.matmul %1, %2, %cst {dimension_numbers = #tpu.dot_dimension_numbers<[1], [0], [0], [1], [0, 0, 1, 1], [], []>} : vector<8x128xbf16>, vector<128x512xbf16>, vector<8x512xf32> -> vector<8x512xf32>
    %c0_3 = arith.constant 0 : index
    %c0_4 = arith.constant 0 : index
    %4 = vector.load %arg3[%c0_3, %c0_4] : memref<1x512xf32, #tpu.memory_space<vmem>>, vector<1x512xf32>
    %5 = vector.broadcast %4 : vector<1x512xf32> to vector<8x512xf32>
    %6 = arith.addf %3, %5 : vector<8x512xf32>
    %cst_5 = arith.constant 0.000000e+00 : f32
    %7 = vector.broadcast %cst_5 : f32 to vector<8x512xf32>
    %8 = arith.maximumf %6, %7 : vector<8x512xf32>
    %9 = arith.truncf %8 : vector<8x512xf32> to vector<8x512xbf16>
    %c0_6 = arith.constant 0 : index
    %c0_7 = arith.constant 0 : index
    %10 = vector.load %arg4[%c0_6, %c0_7] : memref<512x256xbf16, #tpu.memory_space<vmem>>, vector<512x256xbf16>
    %cst_8 = arith.constant dense<0.000000e+00> : vector<8x256xf32>
    %11 = tpu.matmul %9, %10, %cst_8 {dimension_numbers = #tpu.dot_dimension_numbers<[1], [0], [0], [1], [0, 0, 1, 1], [], []>} : vector<8x512xbf16>, vector<512x256xbf16>, vector<8x256xf32> -> vector<8x256xf32>
    %c0_9 = arith.constant 0 : index
    %c0_10 = arith.constant 0 : index
    %12 = vector.load %arg5[%c0_9, %c0_10] : memref<1x256xf32, #tpu.memory_space<vmem>>, vector<1x256xf32>
    %13 = vector.broadcast %12 : vector<1x256xf32> to vector<8x256xf32>
    %14 = arith.addf %11, %13 : vector<8x256xf32>
    %cst_11 = arith.constant 0.000000e+00 : f32
    %15 = vector.broadcast %cst_11 : f32 to vector<8x256xf32>
    %16 = arith.maximumf %14, %15 : vector<8x256xf32>
    %17 = arith.truncf %16 : vector<8x256xf32> to vector<8x256xbf16>
    %c0_12 = arith.constant 0 : index
    %c0_13 = arith.constant 0 : index
    %18 = vector.load %arg6[%c0_12, %c0_13] : memref<256x128xbf16, #tpu.memory_space<vmem>>, vector<256x128xbf16>
    %cst_14 = arith.constant dense<0.000000e+00> : vector<8x128xf32>
    %19 = tpu.matmul %17, %18, %cst_14 {dimension_numbers = #tpu.dot_dimension_numbers<[1], [0], [0], [1], [0, 0, 1, 1], [], []>} : vector<8x256xbf16>, vector<256x128xbf16>, vector<8x128xf32> -> vector<8x128xf32>
    %c0_15 = arith.constant 0 : index
    %c0_16 = arith.constant 0 : index
    %20 = vector.load %arg7[%c0_15, %c0_16] : memref<1x128xf32, #tpu.memory_space<vmem>>, vector<1x128xf32>
    %21 = vector.broadcast %20 : vector<1x128xf32> to vector<8x128xf32>
    %22 = arith.addf %19, %21 : vector<8x128xf32>
    %c0_17 = arith.constant 0 : index
    %c0_18 = arith.constant 0 : index
    %23 = vector.load %arg8[%c0_17, %c0_18] : memref<8x128xf32, #tpu.memory_space<vmem>>, vector<8x128xf32>
    tpu.vector_store %arg8[%c0_17, %c0_18], %22 {strides = array<i32>} : memref<8x128xf32, #tpu.memory_space<vmem>>, vector<8x128xf32>,
    return
  }
  func.func @transform_0(%arg0: i32) -> (i32, i32) {
    %c0_i32 = arith.constant 0 : i32
    %c0_i32_0 = arith.constant 0 : i32
    return %arg0, %c0_i32 : i32, i32
  }
  func.func @transform_1(%arg0: i32) -> (i32, i32) {
    %c0_i32 = arith.constant 0 : i32
    %c0_i32_0 = arith.constant 0 : i32
    %c0_i32_1 = arith.constant 0 : i32
    return %c0_i32, %c0_i32_0 : i32, i32
  }
  func.func @transform_2(%arg0: i32) -> (i32, i32) {
    %c0_i32 = arith.constant 0 : i32
    %c0_i32_0 = arith.constant 0 : i32
    %c0_i32_1 = arith.constant 0 : i32
    return %c0_i32, %c0_i32_0 : i32, i32
  }
  func.func @transform_3(%arg0: i32) -> (i32, i32) {
    %c0_i32 = arith.constant 0 : i32
    %c0_i32_0 = arith.constant 0 : i32
    %c0_i32_1 = arith.constant 0 : i32
    return %c0_i32, %c0_i32_0 : i32, i32
  }
  func.func @transform_4(%arg0: i32) -> (i32, i32) {
    %c0_i32 = arith.constant 0 : i32
    %c0_i32_0 = arith.constant 0 : i32
    %c0_i32_1 = arith.constant 0 : i32
    return %c0_i32, %c0_i32_0 : i32, i32
  }
  func.func @transform_5(%arg0: i32) -> (i32, i32) {
    %c0_i32 = arith.constant 0 : i32
    %c0_i32_0 = arith.constant 0 : i32
    %c0_i32_1 = arith.constant 0 : i32
    return %c0_i32, %c0_i32_0 : i32, i32
  }
  func.func @transform_6(%arg0: i32) -> (i32, i32) {
    %c0_i32 = arith.constant 0 : i32
    %c0_i32_0 = arith.constant 0 : i32
    %c0_i32_1 = arith.constant 0 : i32
    return %c0_i32, %c0_i32_0 : i32, i32
  }
  func.func @transform_7(%arg0: i32) -> (i32, i32) {
    %c0_i32 = arith.constant 0 : i32
    %c0_i32_0 = arith.constant 0 : i32
    return %arg0, %c0_i32 : i32, i32
  }
}

</mosaic_0001>

<llo_original>
// kernel: tpu_custom_call.1
$region0: #{tpu_custom_call.1}
  #allocation0 [shape = 'u32[]', space=smem, size = 0x4, offset = 0x4, fixed_abs, tag = 'smem constant byte address 0x4 - core index']
  #allocation1 [shape = 'u32[72,128]{1,0:T(1,128)}', space=vmem, size = 0x9000, scoped, tag = 'internal scratch']
  %s0 = inlined_call_operand.hbm [shape: f32[8,128], index: 0, kind: input, shape index: {}]
  %s1 = inlined_call_operand.hbm [shape: bf16[128,512], index: 1, kind: input, shape index: {}]
  %s2 = inlined_call_operand.hbm [shape: f32[1,512], index: 2, kind: input, shape index: {}]
  %s3 = inlined_call_operand.hbm [shape: bf16[512,256], index: 3, kind: input, shape index: {}]
  %s4 = inlined_call_operand.vmem [shape: f32[1,256], index: 4, kind: input, shape index: {}]
  %s5 = inlined_call_operand.hbm [shape: bf16[256,128], index: 5, kind: input, shape index: {}]
  %s6 = inlined_call_operand.vmem [shape: f32[1,128], index: 6, kind: input, shape index: {}]
  %s7 = inlined_call_operand.hbm [shape: f32[8,128], index: 7, kind: output, shape index: {}]
  %s8 = sld [smem:[#allocation0]]
  $region58: #{tpu_custom_call.1} parent=0
    _
  %s10 = ssub.s32 1, %s8
  %s11 = scalar_select 0, %s10, %s8
  $region1: #{tpu_custom_call.1} parent=0
    #allocation2 [shape = 'u8[4096]{0}', space=vmem, size = 0x1000, scoped, tag = 'input window, operand 0, single buffered']
    #allocation3 [shape = 's32[1]{0}', space=sflag, size = 0x4, scoped, tag = 'scoped memory for tpu_custom_call.1']
    #allocation4 [shape = 's32[1]{0}', space=sflag, size = 0x4, scoped, tag = 'scoped memory for tpu_custom_call.1']
    #allocation5 [shape = 'u8[131072]{0}', space=vmem, size = 0x20000, scoped, tag = 'input window, operand 1, single buffered']
    #allocation6 [shape = 's32[1]{0}', space=sflag, size = 0x4, scoped, tag = 'scoped memory for tpu_custom_call.1']
    #allocation7 [shape = 'u8[2048]{0}', space=vmem, size = 0x800, scoped, tag = 'input window, operand 2, single buffered']
    #allocation8 [shape = 'u8[262144]{0}', space=vmem, size = 0x40000, scoped, tag = 'input window, operand 3, single buffered']
    #allocation9 [shape = 's32[1]{0}', space=sflag, size = 0x4, scoped, tag = 'scoped memory for tpu_custom_call.1']
    #allocation10 [shape = 'u8[65536]{0}', space=vmem, size = 0x10000, scoped, tag = 'input window, operand 5, single buffered']
    #allocation11 [shape = 'u8[4096]{0}', space=vmem, size = 0x1000, scoped, tag = 'output window, operand 0, single buffered']
    %12 = vsyncpa [#allocation3], 0
    %13 = vsyncpa [#allocation6], 0
    %14 = vsyncpa [#allocation9], 0
    %15 = vsyncpa [#allocation4], 0
    // Predicated region
    $region2: #{tpu_custom_call.1} parent=1 // pred_check
      _
    $region3: #{tpu_custom_call.1} parent=1 // pred_check_branch
      %17 = sbr.rel (0) target = $region5
    $region4: #{tpu_custom_call.1} parent=1 // pred_region
      %19 = vsyncadd [#allocation3], 0
      %s21 = sshll.u32 %s0, 4
      %s22 = int_to_ptr.hbm [resolvable:$true] %s21
      %s23 = sshll.u32 [#allocation2], 4
      %s24 = int_to_ptr.vmem [resolvable:$true] %s23
      %26 = dma.hbm_to_vmem [thread:$0]  %s22, 128, %s24, [#allocation3]
    $region5: #{tpu_custom_call.1} parent=1 // pred_fallthru
      _
    // Predicated region
    $region6: #{tpu_custom_call.1} parent=1 // pred_check
      _
    $region7: #{tpu_custom_call.1} parent=1 // pred_check_branch
      %28 = sbr.rel (0) target = $region9
    $region8: #{tpu_custom_call.1} parent=1 // pred_region
      %30 = vsyncadd [#allocation6], 0
      %s31 = sshll.u32 %s1, 4
      %s32 = int_to_ptr.hbm [resolvable:$true] %s31
      %s33 = sshll.u32 [#allocation5], 4
      %s34 = int_to_ptr.vmem [resolvable:$true] %s33
      %39 = dma.hbm_to_vmem [thread:$0]  %s32, 4096, %s34, [#allocation6], 256, 256, 16
    $region9: #{tpu_custom_call.1} parent=1 // pred_fallthru
      _
    // Predicated region
    $region10: #{tpu_custom_call.1} parent=1 // pred_check
      _
    $region11: #{tpu_custom_call.1} parent=1 // pred_check_branch
      %41 = sbr.rel (0) target = $region13
    $region12: #{tpu_custom_call.1} parent=1 // pred_region
      %43 = vsyncadd [#allocation6], 0
      %s45 = sshll.u32 %s2, 4
      %s46 = int_to_ptr.hbm [resolvable:$true] %s45
      %s47 = sshll.u32 [#allocation7], 4
      %s48 = int_to_ptr.vmem [resolvable:$true] %s47
      %50 = dma.hbm_to_vmem [thread:$0]  %s46, 64, %s48, [#allocation6]
    $region13: #{tpu_custom_call.1} parent=1 // pred_fallthru
      _
    // Predicated region
    $region14: #{tpu_custom_call.1} parent=1 // pred_check
      _
    $region15: #{tpu_custom_call.1} parent=1 // pred_check_branch
      %52 = sbr.rel (0) target = $region17
    $region16: #{tpu_custom_call.1} parent=1 // pred_region
      %54 = vsyncadd [#allocation9], 0
      %s55 = sshll.u32 %s3, 4
      %s56 = int_to_ptr.hbm [resolvable:$true] %s55
      %s57 = sshll.u32 [#allocation8], 4
      %s58 = int_to_ptr.vmem [resolvable:$true] %s57
      %63 = dma.hbm_to_vmem [thread:$0]  %s56, 8192, %s58, [#allocation9], 128, 128, 8
    $region17: #{tpu_custom_call.1} parent=1 // pred_fallthru
      _
    // Predicated region
    $region18: #{tpu_custom_call.1} parent=1 // pred_check
      _
    $region19: #{tpu_custom_call.1} parent=1 // pred_check_branch
      %65 = sbr.rel (0) target = $region21
    $region20: #{tpu_custom_call.1} parent=1 // pred_region
      _
    $region21: #{tpu_custom_call.1} parent=1 // pred_fallthru
      _
    // Predicated region
    $region22: #{tpu_custom_call.1} parent=1 // pred_check
      _
    $region23: #{tpu_custom_call.1} parent=1 // pred_check_branch
      %67 = sbr.rel (0) target = $region25
    $region24: #{tpu_custom_call.1} parent=1 // pred_region
      %69 = vsyncadd [#allocation9], 0
      %s70 = sshll.u32 %s5, 4
      %s71 = int_to_ptr.hbm [resolvable:$true] %s70
      %s72 = sshll.u32 [#allocation10], 4
      %s73 = int_to_ptr.vmem [resolvable:$true] %s72
      %78 = dma.hbm_to_vmem [thread:$0]  %s71, 2048, %s73, [#allocation9], 64, 64, 4
    $region25: #{tpu_custom_call.1} parent=1 // pred_fallthru
      _
    // Predicated region
    $region26: #{tpu_custom_call.1} parent=1 // pred_check
      _
    $region27: #{tpu_custom_call.1} parent=1 // pred_check_branch
      %80 = sbr.rel (0) target = $region29
    $region28: #{tpu_custom_call.1} parent=1 // pred_region
      _
    $region29: #{tpu_custom_call.1} parent=1 // pred_fallthru
      _
    // Predicated region
    $region30: #{tpu_custom_call.1} parent=1 // pred_check
      _
    $region31: #{tpu_custom_call.1} parent=1 // pred_check_branch
      %82 = sbr.rel (0) target = $region33
    $region32: #{tpu_custom_call.1} parent=1 // pred_region
      %84 = dma.done [#allocation3], 128
    $region33: #{tpu_custom_call.1} parent=1 // pred_fallthru
      _
    // Predicated region
    $region34: #{tpu_custom_call.1} parent=1 // pred_check
      _
    $region35: #{tpu_custom_call.1} parent=1 // pred_check_branch
      %86 = sbr.rel (0) target = $region37
    $region36: #{tpu_custom_call.1} parent=1 // pred_region
      %88 = dma.done [#allocation6], 4096
    $region37: #{tpu_custom_call.1} parent=1 // pred_fallthru
      _
    // Predicated region
    $region38: #{tpu_custom_call.1} parent=1 // pred_check
      _
    $region39: #{tpu_custom_call.1} parent=1 // pred_check_branch
      %90 = sbr.rel (0) target = $region41
    $region40: #{tpu_custom_call.1} parent=1 // pred_region
      %92 = dma.done [#allocation6], 64
    $region41: #{tpu_custom_call.1} parent=1 // pred_fallthru
      _
    // Predicated region
    $region42: #{tpu_custom_call.1} parent=1 // pred_check
      _
    $region43: #{tpu_custom_call.1} parent=1 // pred_check_branch
      %94 = sbr.rel (0) target = $region45
    $region44: #{tpu_custom_call.1} parent=1 // pred_region
      %96 = dma.done [#allocation9], 8192
    $region45: #{tpu_custom_call.1} parent=1 // pred_fallthru
      _
    // Predicated region
    $region46: #{tpu_custom_call.1} parent=1 // pred_check
      _
    $region47: #{tpu_custom_call.1} parent=1 // pred_check_branch
      %98 = sbr.rel (0) target = $region49
    $region48: #{tpu_custom_call.1} parent=1 // pred_region
      %100 = dma.done [#allocation9], 2048
    $region49: #{tpu_custom_call.1} parent=1 // pred_fallthru
      _
    %v101 = vld [vmem:[#allocation2] sm:$0xff]
    %v102 = vpack.c.bf16 %v101, %v101
    %v103 = vld [vmem:[#allocation5] sm:$0xff]
    %v104 = vld [vmem:[#allocation5 + $0x8] sm:$0xff]
    %v105 = vld [vmem:[#allocation5 + $0x10] sm:$0xff]
    %v106 = vld [vmem:[#allocation5 + $0x18] sm:$0xff]
    %v107 = vld [vmem:[#allocation5 + $0x20] sm:$0xff]
    %v108 = vld [vmem:[#allocation5 + $0x28] sm:$0xff]
    %v109 = vld [vmem:[#allocation5 + $0x30] sm:$0xff]
    %v110 = vld [vmem:[#allocation5 + $0x38] sm:$0xff]
    %v111 = vld [vmem:[#allocation5 + $0x40] sm:$0xff]
    %v112 = vld [vmem:[#allocation5 + $0x48] sm:$0xff]
    %v113 = vld [vmem:[#allocation5 + $0x50] sm:$0xff]
    %v114 = vld [vmem:[#allocation5 + $0x58] sm:$0xff]
    %v115 = vld [vmem:[#allocation5 + $0x60] sm:$0xff]
    %v116 = vld [vmem:[#allocation5 + $0x68] sm:$0xff]
    %v117 = vld [vmem:[#allocation5 + $0x70] sm:$0xff]
    %v118 = vld [vmem:[#allocation5 + $0x78] sm:$0xff]
    %v119 = vld [vmem:[#allocation5 + $0x80] sm:$0xff]
    %v120 = vld [vmem:[#allocation5 + $0x88] sm:$0xff]
    %v121 = vld [vmem:[#allocation5 + $0x90] sm:$0xff]
    %v122 = vld [vmem:[#allocation5 + $0x98] sm:$0xff]
    %v123 = vld [vmem:[#allocation5 + $0xa0] sm:$0xff]
    %v124 = vld [vmem:[#allocation5 + $0xa8] sm:$0xff]
    %v125 = vld [vmem:[#allocation5 + $0xb0] sm:$0xff]
    %v126 = vld [vmem:[#allocation5 + $0xb8] sm:$0xff]
    %v127 = vld [vmem:[#allocation5 + $0xc0] sm:$0xff]
    %v128 = vld [vmem:[#allocation5 + $0xc8] sm:$0xff]
    %v129 = vld [vmem:[#allocation5 + $0xd0] sm:$0xff]
    %v130 = vld [vmem:[#allocation5 + $0xd8] sm:$0xff]
    %v131 = vld [vmem:[#allocation5 + $0xe0] sm:$0xff]
    %v132 = vld [vmem:[#allocation5 + $0xe8] sm:$0xff]
    %v133 = vld [vmem:[#allocation5 + $0xf0] sm:$0xff]
    %v134 = vld [vmem:[#allocation5 + $0xf8] sm:$0xff]
    %v135 = vld [vmem:[#allocation7] sm:$0xf]
    %v137 = vperm.slane %v135, 0
    %v138 = vperm.slane %v135, 1
    %v139 = vperm.slane %v135, 2
    %v140 = vperm.slane %v135, 3
    %v177 = vunpack.c.l.b16 %v103
    %v178 = vunpack.c.h.b16 %v103
    %v179 = vunpack.c.l.b16 %v104
    %v180 = vunpack.c.h.b16 %v104
    %v181 = vunpack.c.l.b16 %v105
    %v182 = vunpack.c.h.b16 %v105
    %v183 = vunpack.c.l.b16 %v106
    %v184 = vunpack.c.h.b16 %v106
    %v185 = vunpack.c.l.b16 %v107
    %v186 = vunpack.c.h.b16 %v107
    %v187 = vunpack.c.l.b16 %v108
    %v188 = vunpack.c.h.b16 %v108
    %v189 = vunpack.c.l.b16 %v109
    %v190 = vunpack.c.h.b16 %v109
    %v191 = vunpack.c.l.b16 %v110
    %v192 = vunpack.c.h.b16 %v110
    %v193 = vunpack.c.l.b16 %v111
    %v194 = vunpack.c.h.b16 %v111
    %v195 = vunpack.c.l.b16 %v112
    %v196 = vunpack.c.h.b16 %v112
    %v197 = vunpack.c.l.b16 %v113
    %v198 = vunpack.c.h.b16 %v113
    %v199 = vunpack.c.l.b16 %v114
    %v200 = vunpack.c.h.b16 %v114
    %v201 = vunpack.c.l.b16 %v115
    %v202 = vunpack.c.h.b16 %v115
    %v203 = vunpack.c.l.b16 %v116
    %v204 = vunpack.c.h.b16 %v116
    %v205 = vunpack.c.l.b16 %v117
    %v206 = vunpack.c.h.b16 %v117
    %v207 = vunpack.c.l.b16 %v118
    %v208 = vunpack.c.h.b16 %v118
    %v209 = vunpack.c.l.b16 %v119
    %v210 = vunpack.c.h.b16 %v119
    %v211 = vunpack.c.l.b16 %v120
    %v212 = vunpack.c.h.b16 %v120
    %v213 = vunpack.c.l.b16 %v121
    %v214 = vunpack.c.h.b16 %v121
    %v215 = vunpack.c.l.b16 %v122
    %v216 = vunpack.c.h.b16 %v122
    %v217 = vunpack.c.l.b16 %v123
    %v218 = vunpack.c.h.b16 %v123
    %v219 = vunpack.c.l.b16 %v124
    %v220 = vunpack.c.h.b16 %v124
    %v221 = vunpack.c.l.b16 %v125
    %v222 = vunpack.c.h.b16 %v125
    %v223 = vunpack.c.l.b16 %v126
    %v224 = vunpack.c.h.b16 %v126
    %v225 = vunpack.c.l.b16 %v127
    %v226 = vunpack.c.h.b16 %v127
    %v227 = vunpack.c.l.b16 %v128
    %v228 = vunpack.c.h.b16 %v128
    %v229 = vunpack.c.l.b16 %v129
    %v230 = vunpack.c.h.b16 %v129
    %v231 = vunpack.c.l.b16 %v130
    %v232 = vunpack.c.h.b16 %v130
    %v233 = vunpack.c.l.b16 %v131
    %v234 = vunpack.c.h.b16 %v131
    %v235 = vunpack.c.l.b16 %v132
    %v236 = vunpack.c.h.b16 %v132
    %v237 = vunpack.c.l.b16 %v133
    %v238 = vunpack.c.h.b16 %v133
    %v239 = vunpack.c.l.b16 %v134
    %v240 = vunpack.c.h.b16 %v134
    %v241 = vpack.c.b16 %v181, %v177
    %v242 = vpack.c.b16 %v182, %v178
    %v243 = vpack.c.b16 %v183, %v179
    %v244 = vpack.c.b16 %v184, %v180
    %v245 = vpack.c.b16 %v189, %v185
    %v246 = vpack.c.b16 %v190, %v186
    %v247 = vpack.c.b16 %v191, %v187
    %v248 = vpack.c.b16 %v192, %v188
    %v249 = vpack.c.b16 %v197, %v193
    %v250 = vpack.c.b16 %v198, %v194
    %v251 = vpack.c.b16 %v199, %v195
    %v252 = vpack.c.b16 %v200, %v196
    %v253 = vpack.c.b16 %v205, %v201
    %v254 = vpack.c.b16 %v206, %v202
    %v255 = vpack.c.b16 %v207, %v203
    %v256 = vpack.c.b16 %v208, %v204
    %v257 = vpack.c.b16 %v213, %v209
    %v258 = vpack.c.b16 %v214, %v210
    %v259 = vpack.c.b16 %v215, %v211
    %v260 = vpack.c.b16 %v216, %v212
    %v261 = vpack.c.b16 %v221, %v217
    %v262 = vpack.c.b16 %v222, %v218
    %v263 = vpack.c.b16 %v223, %v219
    %v264 = vpack.c.b16 %v224, %v220
    %v265 = vpack.c.b16 %v229, %v225
    %v266 = vpack.c.b16 %v230, %v226
    %v267 = vpack.c.b16 %v231, %v227
    %v268 = vpack.c.b16 %v232, %v228
    %v269 = vpack.c.b16 %v237, %v233
    %v270 = vpack.c.b16 %v238, %v234
    %v271 = vpack.c.b16 %v239, %v235
    %v272 = vpack.c.b16 %v240, %v236
    %305 = vmatpush.bf16.msra.mxu0 %v269
    %306 = vmatpush.bf16.msra.mxu0 %v265
    %307 = vmatpush.bf16.msra.mxu0 %v261
    %308 = vmatpush.bf16.msra.mxu0 %v257
    %309 = vmatpush.bf16.msra.mxu0 %v253
    %310 = vmatpush.bf16.msra.mxu0 %v249
    %311 = vmatpush.bf16.msra.mxu0 %v245
    %312 = vmatpush.bf16.msra.mxu0 %v241
    %313 = vmatmul.bf16.gmra.mxu0 %v102
    %v314 = vpop.f32.mrf.mxu0
    %v315 = vadd.f32 %v137, %v314
    %v316 = vpop.f32.mrf.mxu0
    %317 = vdwg.mxu0
    %318 = vmatpush.bf16.msra.mxu0 %v270
    %319 = vmatpush.bf16.msra.mxu0 %v266
    %320 = vmatpush.bf16.msra.mxu0 %v262
    %321 = vmatpush.bf16.msra.mxu0 %v258
    %322 = vmatpush.bf16.msra.mxu0 %v254
    %323 = vmatpush.bf16.msra.mxu0 %v250
    %324 = vmatpush.bf16.msra.mxu0 %v246
    %325 = vmatpush.bf16.msra.mxu0 %v242
    %326 = vmatmul.bf16.gmra.mxu0 %v102
    %v327 = vpop.f32.mrf.mxu0
    %v328 = vadd.f32 %v138, %v327
    %v329 = vpop.f32.mrf.mxu0
    %330 = vdwg.mxu0
    %331 = vmatpush.bf16.msra.mxu0 %v271
    %332 = vmatpush.bf16.msra.mxu0 %v267
    %333 = vmatpush.bf16.msra.mxu0 %v263
    %334 = vmatpush.bf16.msra.mxu0 %v259
    %335 = vmatpush.bf16.msra.mxu0 %v255
    %336 = vmatpush.bf16.msra.mxu0 %v251
    %337 = vmatpush.bf16.msra.mxu0 %v247
    %338 = vmatpush.bf16.msra.mxu0 %v243
    %339 = vmatmul.bf16.gmra.mxu0 %v102
    %v340 = vpop.f32.mrf.mxu0
    %v341 = vadd.f32 %v139, %v340
    %v342 = vpop.f32.mrf.mxu0
    %343 = vdwg.mxu0
    %344 = vmatpush.bf16.msra.mxu0 %v272
    %345 = vmatpush.bf16.msra.mxu0 %v268
    %346 = vmatpush.bf16.msra.mxu0 %v264
    %347 = vmatpush.bf16.msra.mxu0 %v260
    %348 = vmatpush.bf16.msra.mxu0 %v256
    %349 = vmatpush.bf16.msra.mxu0 %v252
    %350 = vmatpush.bf16.msra.mxu0 %v248
    %351 = vmatpush.bf16.msra.mxu0 %v244
    %352 = vmatmul.bf16.gmra.mxu0 %v102
    %v353 = vpop.f32.mrf.mxu0
    %v354 = vadd.f32 %v140, %v353
    %v355 = vpop.f32.mrf.mxu0
    %356 = vdwg.mxu0
    %v357 = vmax.f32 %v315, 0.0
    %v358 = vmax.f32 %v328, 0.0
    %v359 = vmax.f32 %v341, 0.0
    %v360 = vmax.f32 %v354, 0.0
    %v361 = vpack.c.bf16 %v357, %v357
    %v362 = vpack.c.bf16 %v358, %v358
    %v363 = vpack.c.bf16 %v359, %v359
    %v364 = vpack.c.bf16 %v360, %v360
    %v365 = vld [vmem:[#allocation8] sm:$0xff]
    %v366 = vld [vmem:[#allocation8 + $0x8] sm:$0xff]
    %v367 = vld [vmem:[#allocation8 + $0x10] sm:$0xff]
    %v368 = vld [vmem:[#allocation8 + $0x18] sm:$0xff]
    %v369 = vld [vmem:[#allocation8 + $0x20] sm:$0xff]
    %v370 = vld [vmem:[#allocation8 + $0x28] sm:$0xff]
    %v371 = vld [vmem:[#allocation8 + $0x30] sm:$0xff]
    %v372 = vld [vmem:[#allocation8 + $0x38] sm:$0xff]
    %v373 = vld [vmem:[#allocation8 + $0x40] sm:$0xff]
    %v374 = vld [vmem:[#allocation8 + $0x48] sm:$0xff]
    %v375 = vld [vmem:[#allocation8 + $0x50] sm:$0xff]
    %v376 = vld [vmem:[#allocation8 + $0x58] sm:$0xff]
    %v377 = vld [vmem:[#allocation8 + $0x60] sm:$0xff]
    %v378 = vld [vmem:[#allocation8 + $0x68] sm:$0xff]
    %v379 = vld [vmem:[#allocation8 + $0x70] sm:$0xff]
    %v380 = vld [vmem:[#allocation8 + $0x78] sm:$0xff]
    %v381 = vld [vmem:[#allocation8 + $0x80] sm:$0xff]
    %v382 = vld [vmem:[#allocation8 + $0x88] sm:$0xff]
    %v383 = vld [vmem:[#allocation8 + $0x90] sm:$0xff]
    %v384 = vld [vmem:[#allocation8 + $0x98] sm:$0xff]
    %v385 = vld [vmem:[#allocation8 + $0xa0] sm:$0xff]
    %v386 = vld [vmem:[#allocation8 + $0xa8] sm:$0xff]
    %v387 = vld [vmem:[#allocation8 + $0xb0] sm:$0xff]
    %v388 = vld [vmem:[#allocation8 + $0xb8] sm:$0xff]
    %v389 = vld [vmem:[#allocation8 + $0xc0] sm:$0xff]
    %v390 = vld [vmem:[#allocation8 + $0xc8] sm:$0xff]
    %v391 = vld [vmem:[#allocation8 + $0xd0] sm:$0xff]
    %v392 = vld [vmem:[#allocation8 + $0xd8] sm:$0xff]
    %v393 = vld [vmem:[#allocation8 + $0xe0] sm:$0xff]
    %v394 = vld [vmem:[#allocation8 + $0xe8] sm:$0xff]
    %v395 = vld [vmem:[#allocation8 + $0xf0] sm:$0xff]
    %v396 = vld [vmem:[#allocation8 + $0xf8] sm:$0xff]
    %v397 = vld [vmem:[#allocation8 + $0x100] sm:$0xff]
    %v398 = vld [vmem:[#allocation8 + $0x108] sm:$0xff]
    %v399 = vld [vmem:[#allocation8 + $0x110] sm:$0xff]
    %v400 = vld [vmem:[#allocation8 + $0x118] sm:$0xff]
    %v401 = vld [vmem:[#allocation8 + $0x120] sm:$0xff]
    %v402 = vld [vmem:[#allocation8 + $0x128] sm:$0xff]
    %v403 = vld [vmem:[#allocation8 + $0x130] sm:$0xff]
    %v404 = vld [vmem:[#allocation8 + $0x138] sm:$0xff]
    %v405 = vld [vmem:[#allocation8 + $0x140] sm:$0xff]
    %v406 = vld [vmem:[#allocation8 + $0x148] sm:$0xff]
    %v407 = vld [vmem:[#allocation8 + $0x150] sm:$0xff]
    %v408 = vld [vmem:[#allocation8 + $0x158] sm:$0xff]
    %v409 = vld [vmem:[#allocation8 + $0x160] sm:$0xff]
    %v410 = vld [vmem:[#allocation8 + $0x168] sm:$0xff]
    %v411 = vld [vmem:[#allocation8 + $0x170] sm:$0xff]
    %v412 = vld [vmem:[#allocation8 + $0x178] sm:$0xff]
    %v413 = vld [vmem:[#allocation8 + $0x180] sm:$0xff]
    %v414 = vld [vmem:[#allocation8 + $0x188] sm:$0xff]
    %v415 = vld [vmem:[#allocation8 + $0x190] sm:$0xff]
    %v416 = vld [vmem:[#allocation8 + $0x198] sm:$0xff]
    %v417 = vld [vmem:[#allocation8 + $0x1a0] sm:$0xff]
    %v418 = vld [vmem:[#allocation8 + $0x1a8] sm:$0xff]
    %v419 = vld [vmem:[#allocation8 + $0x1b0] sm:$0xff]
    %v420 = vld [vmem:[#allocation8 + $0x1b8] sm:$0xff]
    %v421 = vld [vmem:[#allocation8 + $0x1c0] sm:$0xff]
    %v422 = vld [vmem:[#allocation8 + $0x1c8] sm:$0xff]
    %v423 = vld [vmem:[#allocation8 + $0x1d0] sm:$0xff]
    %v424 = vld [vmem:[#allocation8 + $0x1d8] sm:$0xff]
    %v425 = vld [vmem:[#allocation8 + $0x1e0] sm:$0xff]
    %v426 = vld [vmem:[#allocation8 + $0x1e8] sm:$0xff]
    %v427 = vld [vmem:[#allocation8 + $0x1f0] sm:$0xff]
    %v428 = vld [vmem:[#allocation8 + $0x1f8] sm:$0xff]
    %v429 = vld [vmem:[%s4] sm:$0x3]
    %v431 = vperm.slane %v429, 0
    %v432 = vperm.slane %v429, 1
    %v499 = vunpack.c.l.b16 %v365
    %v500 = vunpack.c.h.b16 %v365
    %v501 = vunpack.c.l.b16 %v366
    %v502 = vunpack.c.h.b16 %v366
    %v503 = vunpack.c.l.b16 %v367
    %v504 = vunpack.c.h.b16 %v367
    %v505 = vunpack.c.l.b16 %v368
    %v506 = vunpack.c.h.b16 %v368
    %v507 = vunpack.c.l.b16 %v369
    %v508 = vunpack.c.h.b16 %v369
    %v509 = vunpack.c.l.b16 %v370
    %v510 = vunpack.c.h.b16 %v370
    %v511 = vunpack.c.l.b16 %v371
    %v512 = vunpack.c.h.b16 %v371
    %v513 = vunpack.c.l.b16 %v372
    %v514 = vunpack.c.h.b16 %v372
    %v515 = vunpack.c.l.b16 %v373
    %v516 = vunpack.c.h.b16 %v373
    %v517 = vunpack.c.l.b16 %v374
    %v518 = vunpack.c.h.b16 %v374
    %v519 = vunpack.c.l.b16 %v375
    %v520 = vunpack.c.h.b16 %v375
    %v521 = vunpack.c.l.b16 %v376
    %v522 = vunpack.c.h.b16 %v376
    %v523 = vunpack.c.l.b16 %v377
    %v524 = vunpack.c.h.b16 %v377
    %v525 = vunpack.c.l.b16 %v378
    %v526 = vunpack.c.h.b16 %v378
    %v527 = vunpack.c.l.b16 %v379
    %v528 = vunpack.c.h.b16 %v379
    %v529 = vunpack.c.l.b16 %v380
    %v530 = vunpack.c.h.b16 %v380
    %v531 = vunpack.c.l.b16 %v381
    %v532 = vunpack.c.h.b16 %v381
    %v533 = vunpack.c.l.b16 %v382
    %v534 = vunpack.c.h.b16 %v382
    %v535 = vunpack.c.l.b16 %v383
    %v536 = vunpack.c.h.b16 %v383
    %v537 = vunpack.c.l.b16 %v384
    %v538 = vunpack.c.h.b16 %v384
    %v539 = vunpack.c.l.b16 %v385
    %v540 = vunpack.c.h.b16 %v385
    %v541 = vunpack.c.l.b16 %v386
    %v542 = vunpack.c.h.b16 %v386
    %v543 = vunpack.c.l.b16 %v387
    %v544 = vunpack.c.h.b16 %v387
    %v545 = vunpack.c.l.b16 %v388
    %v546 = vunpack.c.h.b16 %v388
    %v547 = vunpack.c.l.b16 %v389
    %v548 = vunpack.c.h.b16 %v389
    %v549 = vunpack.c.l.b16 %v390
    %v550 = vunpack.c.h.b16 %v390
    %v551 = vunpack.c.l.b16 %v391
    %v552 = vunpack.c.h.b16 %v391
    %v553 = vunpack.c.l.b16 %v392
    %v554 = vunpack.c.h.b16 %v392
    %v555 = vunpack.c.l.b16 %v393
    %v556 = vunpack.c.h.b16 %v393
    %v557 = vunpack.c.l.b16 %v394
    %v558 = vunpack.c.h.b16 %v394
    %v559 = vunpack.c.l.b16 %v395
    %v560 = vunpack.c.h.b16 %v395
    %v561 = vunpack.c.l.b16 %v396
    %v562 = vunpack.c.h.b16 %v396
    %v563 = vunpack.c.l.b16 %v397
    %v564 = vunpack.c.h.b16 %v397
    %v565 = vunpack.c.l.b16 %v398
    %v566 = vunpack.c.h.b16 %v398
    %v567 = vunpack.c.l.b16 %v399
    %v568 = vunpack.c.h.b16 %v399
    %v569 = vunpack.c.l.b16 %v400
    %v570 = vunpack.c.h.b16 %v400
    %v571 = vunpack.c.l.b16 %v401
    %v572 = vunpack.c.h.b16 %v401
    %v573 = vunpack.c.l.b16 %v402
    %v574 = vunpack.c.h.b16 %v402
    %v575 = vunpack.c.l.b16 %v403
    %v576 = vunpack.c.h.b16 %v403
    %v577 = vunpack.c.l.b16 %v404
    %v578 = vunpack.c.h.b16 %v404
    %v579 = vunpack.c.l.b16 %v405
    %v580 = vunpack.c.h.b16 %v405
    %v581 = vunpack.c.l.b16 %v406
    %v582 = vunpack.c.h.b16 %v406
    %v583 = vunpack.c.l.b16 %v407
    %v584 = vunpack.c.h.b16 %v407
    %v585 = vunpack.c.l.b16 %v408
    %v586 = vunpack.c.h.b16 %v408
    %v587 = vunpack.c.l.b16 %v409
    %v588 = vunpack.c.h.b16 %v409
    %v589 = vunpack.c.l.b16 %v410
    %v590 = vunpack.c.h.b16 %v410
    %v591 = vunpack.c.l.b16 %v411
    %v592 = vunpack.c.h.b16 %v411
    %v593 = vunpack.c.l.b16 %v412
    %v594 = vunpack.c.h.b16 %v412
    %v595 = vunpack.c.l.b16 %v413
    %v596 = vunpack.c.h.b16 %v413
    %v597 = vunpack.c.l.b16 %v414
    %v598 = vunpack.c.h.b16 %v414
    %v599 = vunpack.c.l.b16 %v415
    %v600 = vunpack.c.h.b16 %v415
    %v601 = vunpack.c.l.b16 %v416
    %v602 = vunpack.c.h.b16 %v416
    %v603 = vunpack.c.l.b16 %v417
    %v604 = vunpack.c.h.b16 %v417
    %v605 = vunpack.c.l.b16 %v418
    %v606 = vunpack.c.h.b16 %v418
    %v607 = vunpack.c.l.b16 %v419
    %v608 = vunpack.c.h.b16 %v419
    %v609 = vunpack.c.l.b16 %v420
    %v610 = vunpack.c.h.b16 %v420
    %v611 = vunpack.c.l.b16 %v421
    %v612 = vunpack.c.h.b16 %v421
    %v613 = vunpack.c.l.b16 %v422
    %v614 = vunpack.c.h.b16 %v422
    %v615 = vunpack.c.l.b16 %v423
    %v616 = vunpack.c.h.b16 %v423
    %v617 = vunpack.c.l.b16 %v424
    %v618 = vunpack.c.h.b16 %v424
    %v619 = vunpack.c.l.b16 %v425
    %v620 = vunpack.c.h.b16 %v425
    %v621 = vunpack.c.l.b16 %v426
    %v622 = vunpack.c.h.b16 %v426
    %v623 = vunpack.c.l.b16 %v427
    %v624 = vunpack.c.h.b16 %v427
    %v625 = vunpack.c.l.b16 %v428
    %v626 = vunpack.c.h.b16 %v428
    %v627 = vpack.c.b16 %v501, %v499
    %v628 = vpack.c.b16 %v502, %v500
    %v629 = vpack.c.b16 %v505, %v503
    %v630 = vpack.c.b16 %v506, %v504
    %v631 = vpack.c.b16 %v509, %v507
    %v632 = vpack.c.b16 %v510, %v508
    %v633 = vpack.c.b16 %v513, %v511
    %v634 = vpack.c.b16 %v514, %v512
    %v635 = vpack.c.b16 %v517, %v515
    %v636 = vpack.c.b16 %v518, %v516
    %v637 = vpack.c.b16 %v521, %v519
    %v638 = vpack.c.b16 %v522, %v520
    %v639 = vpack.c.b16 %v525, %v523
    %v640 = vpack.c.b16 %v526, %v524
    %v641 = vpack.c.b16 %v529, %v527
    %v642 = vpack.c.b16 %v530, %v528
    %v643 = vpack.c.b16 %v533, %v531
    %v644 = vpack.c.b16 %v534, %v532
    %v645 = vpack.c.b16 %v537, %v535
    %v646 = vpack.c.b16 %v538, %v536
    %v647 = vpack.c.b16 %v541, %v539
    %v648 = vpack.c.b16 %v542, %v540
    %v649 = vpack.c.b16 %v545, %v543
    %v650 = vpack.c.b16 %v546, %v544
    %v651 = vpack.c.b16 %v549, %v547
    %v652 = vpack.c.b16 %v550, %v548
    %v653 = vpack.c.b16 %v553, %v551
    %v654 = vpack.c.b16 %v554, %v552
    %v655 = vpack.c.b16 %v557, %v555
    %v656 = vpack.c.b16 %v558, %v556
    %v657 = vpack.c.b16 %v561, %v559
    %v658 = vpack.c.b16 %v562, %v560
    %v659 = vpack.c.b16 %v565, %v563
    %v660 = vpack.c.b16 %v566, %v564
    %v661 = vpack.c.b16 %v569, %v567
    %v662 = vpack.c.b16 %v570, %v568
    %v663 = vpack.c.b16 %v573, %v571
    %v664 = vpack.c.b16 %v574, %v572
    %v665 = vpack.c.b16 %v577, %v575
    %v666 = vpack.c.b16 %v578, %v576
    %v667 = vpack.c.b16 %v581, %v579
    %v668 = vpack.c.b16 %v582, %v580
    %v669 = vpack.c.b16 %v585, %v583
    %v670 = vpack.c.b16 %v586, %v584
    %v671 = vpack.c.b16 %v589, %v587
    %v672 = vpack.c.b16 %v590, %v588
    %v673 = vpack.c.b16 %v593, %v591
    %v674 = vpack.c.b16 %v594, %v592
    %v675 = vpack.c.b16 %v597, %v595
    %v676 = vpack.c.b16 %v598, %v596
    %v677 = vpack.c.b16 %v601, %v599
    %v678 = vpack.c.b16 %v602, %v600
    %v679 = vpack.c.b16 %v605, %v603
    %v680 = vpack.c.b16 %v606, %v604
    %v681 = vpack.c.b16 %v609, %v607
    %v682 = vpack.c.b16 %v610, %v608
    %v683 = vpack.c.b16 %v613, %v611
    %v684 = vpack.c.b16 %v614, %v612
    %v685 = vpack.c.b16 %v617, %v615
    %v686 = vpack.c.b16 %v618, %v616
    %v687 = vpack.c.b16 %v621, %v619
    %v688 = vpack.c.b16 %v622, %v620
    %v689 = vpack.c.b16 %v625, %v623
    %v690 = vpack.c.b16 %v626, %v624
    %755 = vmatpush.bf16.msra.mxu0 %v641
    %756 = vmatpush.bf16.msra.mxu0 %v639
    %757 = vmatpush.bf16.msra.mxu0 %v637
    %758 = vmatpush.bf16.msra.mxu0 %v635
    %759 = vmatpush.bf16.msra.mxu0 %v633
    %760 = vmatpush.bf16.msra.mxu0 %v631
    %761 = vmatpush.bf16.msra.mxu0 %v629
    %762 = vmatpush.bf16.msra.mxu0 %v627
    %763 = vmatmul.bf16.gmra.mxu0 %v361
    %v764 = vpop.f32.mrf.mxu0
    %v765 = vadd.f32 %v431, %v764
    %v766 = vpop.f32.mrf.mxu0
    %767 = vdwg.mxu0
    %768 = vmatpush.bf16.msra.mxu0 %v657
    %769 = vmatpush.bf16.msra.mxu0 %v655
    %770 = vmatpush.bf16.msra.mxu0 %v653
    %771 = vmatpush.bf16.msra.mxu0 %v651
    %772 = vmatpush.bf16.msra.mxu0 %v649
    %773 = vmatpush.bf16.msra.mxu0 %v647
    %774 = vmatpush.bf16.msra.mxu0 %v645
    %775 = vmatpush.bf16.msra.mxu0 %v643
    %776 = vmatmul.bf16.gmra.mxu0 %v362
    %v777 = vpop.f32.mrf.mxu0
    %v778 = vadd.f32 %v765, %v777
    %v779 = vpop.f32.mrf.mxu0
    %780 = vdwg.mxu0
    %781 = vmatpush.bf16.msra.mxu0 %v673
    %782 = vmatpush.bf16.msra.mxu0 %v671
    %783 = vmatpush.bf16.msra.mxu0 %v669
    %784 = vmatpush.bf16.msra.mxu0 %v667
    %785 = vmatpush.bf16.msra.mxu0 %v665
    %786 = vmatpush.bf16.msra.mxu0 %v663
    %787 = vmatpush.bf16.msra.mxu0 %v661
    %788 = vmatpush.bf16.msra.mxu0 %v659
    %789 = vmatmul.bf16.gmra.mxu0 %v363
    %v790 = vpop.f32.mrf.mxu0
    %v791 = vadd.f32 %v778, %v790
    %v792 = vpop.f32.mrf.mxu0
    %793 = vdwg.mxu0
    %794 = vmatpush.bf16.msra.mxu0 %v689
    %795 = vmatpush.bf16.msra.mxu0 %v687
    %796 = vmatpush.bf16.msra.mxu0 %v685
    %797 = vmatpush.bf16.msra.mxu0 %v683
    %798 = vmatpush.bf16.msra.mxu0 %v681
    %799 = vmatpush.bf16.msra.mxu0 %v679
    %800 = vmatpush.bf16.msra.mxu0 %v677
    %801 = vmatpush.bf16.msra.mxu0 %v675
    %802 = vmatmul.bf16.gmra.mxu0 %v364
    %v803 = vpop.f32.mrf.mxu0
    %v804 = vadd.f32 %v791, %v803
    %v805 = vpop.f32.mrf.mxu0
    %806 = vdwg.mxu0
    %807 = vmatpush.bf16.msra.mxu0 %v642
    %808 = vmatpush.bf16.msra.mxu0 %v640
    %809 = vmatpush.bf16.msra.mxu0 %v638
    %810 = vmatpush.bf16.msra.mxu0 %v636
    %811 = vmatpush.bf16.msra.mxu0 %v634
    %812 = vmatpush.bf16.msra.mxu0 %v632
    %813 = vmatpush.bf16.msra.mxu0 %v630
    %814 = vmatpush.bf16.msra.mxu0 %v628
    %815 = vmatmul.bf16.gmra.mxu0 %v361
    %v816 = vpop.f32.mrf.mxu0
    %v817 = vadd.f32 %v432, %v816
    %v818 = vpop.f32.mrf.mxu0
    %819 = vdwg.mxu0
    %820 = vmatpush.bf16.msra.mxu0 %v658
    %821 = vmatpush.bf16.msra.mxu0 %v656
    %822 = vmatpush.bf16.msra.mxu0 %v654
    %823 = vmatpush.bf16.msra.mxu0 %v652
    %824 = vmatpush.bf16.msra.mxu0 %v650
    %825 = vmatpush.bf16.msra.mxu0 %v648
    %826 = vmatpush.bf16.msra.mxu0 %v646
    %827 = vmatpush.bf16.msra.mxu0 %v644
    %828 = vmatmul.bf16.gmra.mxu0 %v362
    %v829 = vpop.f32.mrf.mxu0
    %v830 = vadd.f32 %v817, %v829
    %v831 = vpop.f32.mrf.mxu0
    %832 = vdwg.mxu0
    %833 = vmatpush.bf16.msra.mxu0 %v674
    %834 = vmatpush.bf16.msra.mxu0 %v672
    %835 = vmatpush.bf16.msra.mxu0 %v670
    %836 = vmatpush.bf16.msra.mxu0 %v668
    %837 = vmatpush.bf16.msra.mxu0 %v666
    %838 = vmatpush.bf16.msra.mxu0 %v664
    %839 = vmatpush.bf16.msra.mxu0 %v662
    %840 = vmatpush.bf16.msra.mxu0 %v660
    %841 = vmatmul.bf16.gmra.mxu0 %v363
    %v842 = vpop.f32.mrf.mxu0
    %v843 = vadd.f32 %v830, %v842
    %v844 = vpop.f32.mrf.mxu0
    %845 = vdwg.mxu0
    %846 = vmatpush.bf16.msra.mxu0 %v690
    %847 = vmatpush.bf16.msra.mxu0 %v688
    %848 = vmatpush.bf16.msra.mxu0 %v686
    %849 = vmatpush.bf16.msra.mxu0 %v684
    %850 = vmatpush.bf16.msra.mxu0 %v682
    %851 = vmatpush.bf16.msra.mxu0 %v680
    %852 = vmatpush.bf16.msra.mxu0 %v678
    %853 = vmatpush.bf16.msra.mxu0 %v676
    %854 = vmatmul.bf16.gmra.mxu0 %v364
    %v855 = vpop.f32.mrf.mxu0
    %v856 = vadd.f32 %v843, %v855
    %v857 = vpop.f32.mrf.mxu0
    %858 = vdwg.mxu0
    %v859 = vmax.f32 %v804, 0.0
    %v860 = vmax.f32 %v856, 0.0
    %v861 = vpack.c.bf16 %v859, %v859
    %v862 = vpack.c.bf16 %v860, %v860
    %v863 = vld [vmem:[#allocation10] sm:$0xf]
    %v864 = vld [vmem:[#allocation10 + $0x4] sm:$0xf]
    %v865 = vld [vmem:[#allocation10 + $0x8] sm:$0xf]
    %v866 = vld [vmem:[#allocation10 + $0xc] sm:$0xf]
    %v867 = vld [vmem:[#allocation10 + $0x10] sm:$0xf]
    %v868 = vld [vmem:[#allocation10 + $0x14] sm:$0xf]
    %v869 = vld [vmem:[#allocation10 + $0x18] sm:$0xf]
    %v870 = vld [vmem:[#allocation10 + $0x1c] sm:$0xf]
    %v871 = vld [vmem:[#allocation10 + $0x20] sm:$0xf]
    %v872 = vld [vmem:[#allocation10 + $0x24] sm:$0xf]
    %v873 = vld [vmem:[#allocation10 + $0x28] sm:$0xf]
    %v874 = vld [vmem:[#allocation10 + $0x2c] sm:$0xf]
    %v875 = vld [vmem:[#allocation10 + $0x30] sm:$0xf]
    %v876 = vld [vmem:[#allocation10 + $0x34] sm:$0xf]
    %v877 = vld [vmem:[#allocation10 + $0x38] sm:$0xf]
    %v878 = vld [vmem:[#allocation10 + $0x3c] sm:$0xf]
    %v879 = vld [vmem:[#allocation10 + $0x40] sm:$0xf]
    %v880 = vld [vmem:[#allocation10 + $0x44] sm:$0xf]
    %v881 = vld [vmem:[#allocation10 + $0x48] sm:$0xf]
    %v882 = vld [vmem:[#allocation10 + $0x4c] sm:$0xf]
    %v883 = vld [vmem:[#allocation10 + $0x50] sm:$0xf]
    %v884 = vld [vmem:[#allocation10 + $0x54] sm:$0xf]
    %v885 = vld [vmem:[#allocation10 + $0x58] sm:$0xf]
    %v886 = vld [vmem:[#allocation10 + $0x5c] sm:$0xf]
    %v887 = vld [vmem:[#allocation10 + $0x60] sm:$0xf]
    %v888 = vld [vmem:[#allocation10 + $0x64] sm:$0xf]
    %v889 = vld [vmem:[#allocation10 + $0x68] sm:$0xf]
    %v890 = vld [vmem:[#allocation10 + $0x6c] sm:$0xf]
    %v891 = vld [vmem:[#allocation10 + $0x70] sm:$0xf]
    %v892 = vld [vmem:[#allocation10 + $0x74] sm:$0xf]
    %v893 = vld [vmem:[#allocation10 + $0x78] sm:$0xf]
    %v894 = vld [vmem:[#allocation10 + $0x7c] sm:$0xf]
    %v895 = vld [vmem:[%s6] sm:$0x1]
    %v897 = vperm.slane %v895, 0
    %v931 = vunpack.c.l.b16 %v863
    %v932 = vunpack.c.l.b16 %v864
    %v933 = vunpack.c.l.b16 %v865
    %v934 = vunpack.c.l.b16 %v866
    %v935 = vunpack.c.l.b16 %v867
    %v936 = vunpack.c.l.b16 %v868
    %v937 = vunpack.c.l.b16 %v869
    %v938 = vunpack.c.l.b16 %v870
    %v939 = vunpack.c.l.b16 %v871
    %v940 = vunpack.c.l.b16 %v872
    %v941 = vunpack.c.l.b16 %v873
    %v942 = vunpack.c.l.b16 %v874
    %v943 = vunpack.c.l.b16 %v875
    %v944 = vunpack.c.l.b16 %v876
    %v945 = vunpack.c.l.b16 %v877
    %v946 = vunpack.c.l.b16 %v878
    %v947 = vunpack.c.l.b16 %v879
    %v948 = vunpack.c.l.b16 %v880
    %v949 = vunpack.c.l.b16 %v881
    %v950 = vunpack.c.l.b16 %v882
    %v951 = vunpack.c.l.b16 %v883
    %v952 = vunpack.c.l.b16 %v884
    %v953 = vunpack.c.l.b16 %v885
    %v954 = vunpack.c.l.b16 %v886
    %v955 = vunpack.c.l.b16 %v887
    %v956 = vunpack.c.l.b16 %v888
    %v957 = vunpack.c.l.b16 %v889
    %v958 = vunpack.c.l.b16 %v890
    %v959 = vunpack.c.l.b16 %v891
    %v960 = vunpack.c.l.b16 %v892
    %v961 = vunpack.c.l.b16 %v893
    %v962 = vunpack.c.l.b16 %v894
    %v963 = vpack.c.b16 %v932, %v931
    %v964 = vpack.c.b16 %v934, %v933
    %v965 = vpack.c.b16 %v936, %v935
    %v966 = vpack.c.b16 %v938, %v937
    %v967 = vpack.c.b16 %v940, %v939
    %v968 = vpack.c.b16 %v942, %v941
    %v969 = vpack.c.b16 %v944, %v943
    %v970 = vpack.c.b16 %v946, %v945
    %v971 = vpack.c.b16 %v948, %v947
    %v972 = vpack.c.b16 %v950, %v949
    %v973 = vpack.c.b16 %v952, %v951
    %v974 = vpack.c.b16 %v954, %v953
    %v975 = vpack.c.b16 %v956, %v955
    %v976 = vpack.c.b16 %v958, %v957
    %v977 = vpack.c.b16 %v960, %v959
    %v978 = vpack.c.b16 %v962, %v961
    %995 = vmatpush.bf16.msra.mxu0 %v970
    %996 = vmatpush.bf16.msra.mxu0 %v969
    %997 = vmatpush.bf16.msra.mxu0 %v968
    %998 = vmatpush.bf16.msra.mxu0 %v967
    %999 = vmatpush.bf16.msra.mxu0 %v966
    %1000 = vmatpush.bf16.msra.mxu0 %v965
    %1001 = vmatpush.bf16.msra.mxu0 %v964
    %1002 = vmatpush.bf16.msra.mxu0 %v963
    %1003 = vmatmul.bf16.gmra.mxu0 %v861
    %v1004 = vpop.f32.mrf.mxu0
    %v1005 = vadd.f32 %v897, %v1004
    %v1006 = vpop.f32.mrf.mxu0
    %1007 = vdwg.mxu0
    %1008 = vmatpush.bf16.msra.mxu0 %v978
    %1009 = vmatpush.bf16.msra.mxu0 %v977
    %1010 = vmatpush.bf16.msra.mxu0 %v976
    %1011 = vmatpush.bf16.msra.mxu0 %v975
    %1012 = vmatpush.bf16.msra.mxu0 %v974
    %1013 = vmatpush.bf16.msra.mxu0 %v973
    %1014 = vmatpush.bf16.msra.mxu0 %v972
    %1015 = vmatpush.bf16.msra.mxu0 %v971
    %1016 = vmatmul.bf16.gmra.mxu0 %v862
    %v1017 = vpop.f32.mrf.mxu0
    %v1018 = vadd.f32 %v1005, %v1017
    %v1019 = vpop.f32.mrf.mxu0
    %1020 = vdwg.mxu0
    %1021 = vst [vmem:[#allocation11] sm:$0xff] %v1018
    // Predicated region
    $region50: #{tpu_custom_call.1} parent=1 // pred_check
      _
    $region51: #{tpu_custom_call.1} parent=1 // pred_check_branch
      %1023 = sbr.rel (0) target = $region53
    $region52: #{tpu_custom_call.1} parent=1 // pred_region
      %1025 = vsyncadd [#allocation4], 0
      %s1027 = sshll.u32 [#allocation11], 4
      %s1028 = int_to_ptr.vmem [resolvable:$true] %s1027
      %s1029 = sshll.u32 %s7, 4
      %s1030 = int_to_ptr.hbm [resolvable:$true] %s1029
      %1032 = dma.vmem_to_hbm [thread:$0]  %s1028, 128, %s1030, [#allocation4]
    $region53: #{tpu_custom_call.1} parent=1 // pred_fallthru
      _
    // Predicated region
    $region54: #{tpu_custom_call.1} parent=1 // pred_check
      _
    $region55: #{tpu_custom_call.1} parent=1 // pred_check_branch
      %1034 = sbr.rel (0) target = $region57
    $region56: #{tpu_custom_call.1} parent=1 // pred_region
      %1036 = dma.done [#allocation4], 128
    $region57: #{tpu_custom_call.1} parent=1 // pred_fallthru
      _
    %1037 = vsyncpa [#allocation3], 1
    %1038 = vsyncpa [#allocation6], 1
    %1039 = vsyncpa [#allocation9], 1
    %1040 = vsyncpa [#allocation4], 1

</llo_original>
